<compile_context>
chip_gen: v7x
topology: tpu7x:2x2x1
jax: 0.10.0
libtpu: 0.0.40
codegen_flags: <defaults>
</compile_context>

<pallas_src>
import jax
import jax.numpy as jnp
from jax.experimental import pallas as pl
from jax.experimental.pallas import tpu as pltpu


def _round_up(x, m):
    return (x + m - 1) // m * m


def _pick_tile(n_p, want):
    """Largest multiple of 128 that divides n_p and is <= max(want, 128)."""
    best = 128
    t = 128
    cap = max(want, 128)
    while t <= min(cap, n_p):
        if n_p % t == 0:
            best = t
        t += 128
    return best


# ---------------------------------------------------------------------------
# Fused kernel, variant A (F_in <= F_out_p): accumulate adj@seq, apply W last.
# ---------------------------------------------------------------------------
def _gcn_kernel_w_last(adj_ref, seq_ref, w_ref, b_ref, a_ref, out_ref, acc_ref):
    k = pl.program_id(2)

    @pl.when(k == 0)
    def _():
        acc_ref[...] = jnp.zeros_like(acc_ref)

    # (TM, TK) @ (TK, F_in) -> (TM, F_in), f32 accumulation.
    acc_ref[...] += jnp.dot(adj_ref[0], seq_ref[0],
                            preferred_element_type=jnp.float32)

    @pl.when(k == pl.num_programs(2) - 1)
    def _():
        # (TM, F_in) @ (F_in, F_out_p) once per output tile, in f32.
        out = jnp.dot(acc_ref[...], w_ref[...].astype(jnp.float32),
                      preferred_element_type=jnp.float32) + b_ref[...]
        alpha = a_ref[0, 0]                                  # scalar from SMEM
        out_ref[0] = jnp.where(out >= 0.0, out, alpha * out).astype(out_ref.dtype)


# ---------------------------------------------------------------------------
# Fused kernel, variant B (F_in > F_out_p): fts tile on the fly, then adj@fts.
# ---------------------------------------------------------------------------
def _gcn_kernel_w_first(adj_ref, seq_ref, w_ref, b_ref, a_ref, out_ref, acc_ref):
    k = pl.program_id(2)

    @pl.when(k == 0)
    def _():
        acc_ref[...] = jnp.zeros_like(acc_ref)

    fts = jnp.dot(seq_ref[0], w_ref[...],
                  preferred_element_type=jnp.float32).astype(seq_ref.dtype)
    acc_ref[...] += jnp.dot(adj_ref[0], fts,
                            preferred_element_type=jnp.float32)

    @pl.when(k == pl.num_programs(2) - 1)
    def _():
        out = acc_ref[...] + b_ref[...]
        alpha = a_ref[0, 0]
        out_ref[0] = jnp.where(out >= 0.0, out, alpha * out).astype(out_ref.dtype)


def gcn_forward(seq, adj, weight_t, bias, alpha, *,
                tile_m=512, tile_k=1024,
                compute_dtype=jnp.bfloat16, vmem_limit_bytes=None):
    """seq: (B,N,F_in), adj: (B,N,N), weight_t: (F_in,F_out),
    bias: (1,F_out) or (F_out,), alpha: scalar/(1,1)  ->  (B,N,F_out)."""
    B, N, F_in = seq.shape
    F_out = weight_t.shape[1]
    out_dtype = seq.dtype

    # ---- tile-friendly, lane-dense padding ---------------------------------
    F_out_p = _round_up(F_out, 128)            # lane-dense output columns
    N_p = _round_up(N, 128)
    TM = _pick_tile(N_p, tile_m)
    TK = _pick_tile(N_p, tile_k)
    # v7x has 2 TensorCores: with a single batch make sure the "parallel" row
    # axis has >= 2 tiles so both cores get work.
    if B == 1 and N_p // TM < 2 and N_p >= 256:
        TM = _pick_tile(N_p, N_p // 2)

    w_last = F_in <= F_out_p

    # ---- pad / cast only when actually needed (adj is the largest tensor;
    #      skip the extra HBM pass when it is already aligned + right dtype).
    def maybe_pad(x, shape_p, dtype):
        if tuple(x.shape) == tuple(shape_p):
            return x if x.dtype == dtype else x.astype(dtype)
        buf = jnp.zeros(shape_p, dtype)
        return buf.at[tuple(slice(0, s) for s in x.shape)].set(x.astype(dtype))

    adj_p = maybe_pad(adj, (B, N_p, N_p), compute_dtype)
    seq_p = maybe_pad(seq, (B, N_p, F_in), compute_dtype)
    w_p = maybe_pad(weight_t, (F_in, F_out_p), compute_dtype)
    bias_p = maybe_pad(jnp.asarray(bias, jnp.float32).reshape(1, F_out),
                       (1, F_out_p), jnp.float32)
    alpha = jnp.asarray(alpha, jnp.float32).reshape(1, 1)

    n_row = N_p // TM
    n_col = N_p // TK
    c_bytes = jnp.dtype(compute_dtype).itemsize
    o_bytes = jnp.dtype(out_dtype).itemsize

    kernel = _gcn_kernel_w_last if w_last else _gcn_kernel_w_first
    acc_cols = F_in if w_last else F_out_p

    flops = 2 * B * N_p * N_p * (F_in if w_last else F_out_p)
    flops += (2 * B * N_p * F_in * F_out_p if w_last
              else 2 * B * n_row * N_p * F_in * F_out_p)
    cost = pl.CostEstimate(
        flops=flops,
        transcendentals=0,
        bytes_accessed=(B * N_p * N_p * c_bytes              # adj (dominant)
                        + B * n_row * N_p * F_in * c_bytes   # seq re-reads
                        + F_in * F_out_p * c_bytes           # W (resident)
                        + B * N_p * F_out_p * o_bytes))      # output

    out_p = pl.pallas_call(
        kernel,
        out_shape=jax.ShapeDtypeStruct((B, N_p, F_out_p), out_dtype),
        grid_spec=pltpu.PrefetchScalarGridSpec(
            num_scalar_prefetch=0,
            grid=(B, n_row, n_col),
            in_specs=[
                pl.BlockSpec((1, TM, TK), lambda b, i, k: (b, i, k)),    # adj tile
                pl.BlockSpec((1, TK, F_in), lambda b, i, k: (b, k, 0)),  # seq tile
                pl.BlockSpec((F_in, F_out_p), lambda b, i, k: (0, 0)),   # W (resident)
                pl.BlockSpec((1, F_out_p), lambda b, i, k: (0, 0)),      # bias (resident)
                pl.BlockSpec(memory_space=pltpu.MemorySpace.SMEM),       # alpha scalar
            ],
            out_specs=pl.BlockSpec((1, TM, F_out_p), lambda b, i, k: (b, i, 0)),
            scratch_shapes=[pltpu.VMEM((TM, acc_cols), jnp.float32)],
        ),
        compiler_params=pltpu.CompilerParams(
            dimension_semantics=("parallel", "parallel", "arbitrary"),
            vmem_limit_bytes=vmem_limit_bytes),
        cost_estimate=cost,
    )(adj_p, seq_p, w_p, bias_p, alpha)

    # strip node / feature padding
    return out_p[:, :N, :F_out]


def init_params(key, in_ft, out_ft):
    """Deterministic parameter init matching GCN.__init__ / weights_init."""
    bound = (6.0 / (in_ft + out_ft)) ** 0.5           # xavier_uniform_ bound
    w = jax.random.uniform(key, (out_ft, in_ft), jnp.float32, -bound, bound)
    weight_t = jnp.transpose(w)                       # (in_ft, out_ft)
    bias = jnp.zeros((1, out_ft), jnp.float32)        # bias.data.fill_(0.0)
    alpha = jnp.full((1, 1), 0.25, jnp.float32)       # nn.PReLU default slope
    return weight_t, bias, alpha


if __name__ == "__main__":
    master_key = jax.random.PRNGKey(0)

    def reference(seq, adj, weight_t, bias, alpha):
        out = jnp.einsum("bnm,bmf->bnf", adj, seq @ weight_t) + bias
        return jnp.where(out >= 0.0, out, alpha * out)

    def run_case(key, B, N, F_in, F_out):
        k_seq, k_adj, k_w = jax.random.split(key, 3)
        seq = jax.random.normal(k_seq, (B, N, F_in), jnp.float32)
        # symmetric, row-normalized dense adjacency
        a_raw = jax.random.uniform(k_adj, (B, N, N), jnp.float32)
        adj = (a_raw + jnp.swapaxes(a_raw, 1, 2)) * 0.5
        adj = adj / jnp.sum(adj, axis=-1, keepdims=True)
        weight_t, bias, alpha = init_params(k_w, F_in, F_out)
        ref = reference(seq, adj, weight_t, bias, 0.25)

        # f32 MXU path (near-exact)
        out = jax.block_until_ready(
            gcn_forward(seq, adj, weight_t, bias, alpha,
                        compute_dtype=jnp.float32))
        assert out.shape == (B, N, F_out)
        assert jnp.allclose(out, ref, atol=1e-4, rtol=1e-4)

        # default bf16 MXU-input path (f32 accumulation) — looser tolerance
        out_bf16 = jax.block_until_ready(
            gcn_forward(seq, adj, weight_t, bias, alpha))
        assert out_bf16.shape == (B, N, F_out)
        assert jnp.allclose(out_bf16, ref, atol=5e-2, rtol=5e-2)

    k1, k2 = jax.random.split(master_key)
    # F_in <= F_out_p  -> W-applied-last fused kernel
    run_case(k1, B=2, N=16, F_in=8, F_out=32)
    # F_in  > F_out_p  -> W-applied-first fused kernel (projection shrinks)
    run_case(k2, B=1, N=16, F_in=256, F_out=64)

    print("KERNEL_OK")
</pallas_src>

<mosaic_0001>
module attributes {stable_mosaic.version = 11 : i64} {
  func.func @_gcn_kernel_w_last(%arg0: i32, %arg1: i32, %arg2: i32, %arg3: memref<1x128x128xf32, #tpu.memory_space<vmem>>, %arg4: memref<1x128x8xf32, #tpu.memory_space<vmem>>, %arg5: memref<8x128xf32, #tpu.memory_space<vmem>>, %arg6: memref<1x128xf32, #tpu.memory_space<vmem>>, %arg7: memref<1x1xf32, #tpu.memory_space<smem>>, %arg8: memref<1x128x128xf32, #tpu.memory_space<vmem>>, %arg9: memref<128x8xf32, #tpu.memory_space<vmem>>) attributes {dimension_semantics = [#tpu.dimension_semantics<parallel>, #tpu.dimension_semantics<parallel>, #tpu.dimension_semantics<arbitrary>], iteration_bounds = array<i64: 2, 1, 1>, scalar_prefetch = 0 : i64, scratch_operands = 1 : i64, tpu.core_type = #tpu.core_type<tc>, window_params = [{transform_indices = @transform_0, window_bounds = array<i64: 1, 128, 128>}, {transform_indices = @transform_1, window_bounds = array<i64: 1, 128, 8>}, {pipeline_mode = #tpu.pipeline_mode<synchronous>, transform_indices = @transform_2, window_bounds = array<i64: 8, 128>}, {pipeline_mode = #tpu.pipeline_mode<synchronous>, transform_indices = @transform_3, window_bounds = array<i64: 1, 128>}, {transform_indices = @transform_4, window_bounds = array<i64: 1, 1>}, {transform_indices = @transform_5, window_bounds = array<i64: 1, 128, 128>}]} {
    %c0_i32 = arith.constant 0 : i32
    %0 = arith.cmpi eq, %arg2, %c0_i32 : i32
    %1 = arith.extui %0 : i1 to i32
    %c0_i32_0 = arith.constant 0 : i32
    %2 = arith.cmpi ne, %1, %c0_i32_0 : i32
    scf.if %2 {
      %cst_12 = arith.constant 0.000000e+00 : f32
      %14 = vector.broadcast %cst_12 : f32 to vector<128x8xf32>
      %c0_13 = arith.constant 0 : index
      %c0_14 = arith.constant 0 : index
      %15 = vector.load %arg9[%c0_13, %c0_14] : memref<128x8xf32, #tpu.memory_space<vmem>>, vector<128x8xf32>
      tpu.vector_store %arg9[%c0_13, %c0_14], %14 {strides = array<i32>} : memref<128x8xf32, #tpu.memory_space<vmem>>, vector<128x8xf32>,
    } else {
    }
    %c0 = arith.constant 0 : index
    %c0_1 = arith.constant 0 : index
    %3 = vector.load %arg9[%c0, %c0_1] : memref<128x8xf32, #tpu.memory_space<vmem>>, vector<128x8xf32>
    %c0_2 = arith.constant 0 : index
    %c0_3 = arith.constant 0 : index
    %c0_4 = arith.constant 0 : index
    %4 = vector.load %arg3[%c0_2, %c0_3, %c0_4] : memref<1x128x128xf32, #tpu.memory_space<vmem>>, vector<1x128x128xf32>
    %5 = vector.shape_cast %4 : vector<1x128x128xf32> to vector<128x128xf32>
    %c0_5 = arith.constant 0 : index
    %c0_6 = arith.constant 0 : index
    %c0_7 = arith.constant 0 : index
    %6 = vector.load %arg4[%c0_5, %c0_6, %c0_7] : memref<1x128x8xf32, #tpu.memory_space<vmem>>, vector<1x128x8xf32>
    %7 = vector.shape_cast %6 : vector<1x128x8xf32> to vector<128x8xf32>
    %cst = arith.constant dense<0.000000e+00> : vector<128x8xf32>
    %8 = tpu.matmul %5, %7, %cst {dimension_numbers = #tpu.dot_dimension_numbers<[1], [0], [0], [1], [0, 0, 1, 1], [], []>} : vector<128x128xf32>, vector<128x8xf32>, vector<128x8xf32> -> vector<128x8xf32>
    %9 = arith.addf %3, %8 : vector<128x8xf32>
    %c0_8 = arith.constant 0 : index
    %c0_9 = arith.constant 0 : index
    %10 = vector.load %arg9[%c0_8, %c0_9] : memref<128x8xf32, #tpu.memory_space<vmem>>, vector<128x8xf32>
    tpu.vector_store %arg9[%c0_8, %c0_9], %9 {strides = array<i32>} : memref<128x8xf32, #tpu.memory_space<vmem>>, vector<128x8xf32>,
    %c0_i32_10 = arith.constant 0 : i32
    %11 = arith.cmpi eq, %arg2, %c0_i32_10 : i32
    %12 = arith.extui %11 : i1 to i32
    %c0_i32_11 = arith.constant 0 : i32
    %13 = arith.cmpi ne, %12, %c0_i32_11 : i32
    scf.if %13 {
      %c0_12 = arith.constant 0 : index
      %c0_13 = arith.constant 0 : index
      %14 = vector.load %arg9[%c0_12, %c0_13] : memref<128x8xf32, #tpu.memory_space<vmem>>, vector<128x8xf32>
      %c0_14 = arith.constant 0 : index
      %c0_15 = arith.constant 0 : index
      %15 = vector.load %arg5[%c0_14, %c0_15] : memref<8x128xf32, #tpu.memory_space<vmem>>, vector<8x128xf32>
      %cst_16 = arith.constant dense<0.000000e+00> : vector<128x128xf32>
      %16 = tpu.matmul %14, %15, %cst_16 {dimension_numbers = #tpu.dot_dimension_numbers<[1], [0], [0], [1], [0, 0, 1, 1], [], []>} : vector<128x8xf32>, vector<8x128xf32>, vector<128x128xf32> -> vector<128x128xf32>
      %c0_17 = arith.constant 0 : index
      %c0_18 = arith.constant 0 : index
      %17 = vector.load %arg6[%c0_17, %c0_18] : memref<1x128xf32, #tpu.memory_space<vmem>>, vector<1x128xf32>
      %18 = vector.broadcast %17 : vector<1x128xf32> to vector<128x128xf32>
      %19 = arith.addf %16, %18 : vector<128x128xf32>
      %c0_19 = arith.constant 0 : index
      %c0_20 = arith.constant 0 : index
      %20 = memref.load %arg7[%c0_19, %c0_20] : memref<1x1xf32, #tpu.memory_space<smem>>
      %cst_21 = arith.constant 0.000000e+00 : f32
      %21 = vector.broadcast %cst_21 : f32 to vector<128x128xf32>
      %22 = arith.cmpf oge, %19, %21 : vector<128x128xf32>
      %23 = vector.broadcast %20 : f32 to vector<128x128xf32>
      %24 = arith.mulf %23, %19 : vector<128x128xf32>
      %25 = arith.select %22, %19, %24 : vector<128x128xi1>, vector<128x128xf32>
      %c0_22 = arith.constant 0 : index
      %c0_23 = arith.constant 0 : index
      %c0_24 = arith.constant 0 : index
      %26 = vector.load %arg8[%c0_22, %c0_23, %c0_24] : memref<1x128x128xf32, #tpu.memory_space<vmem>>, vector<1x128x128xf32>
      %27 = vector.shape_cast %26 : vector<1x128x128xf32> to vector<128x128xf32>
      %28 = vector.shape_cast %25 : vector<128x128xf32> to vector<1x128x128xf32>
      tpu.vector_store %arg8[%c0_22, %c0_23, %c0_24], %28 {strides = array<i32>} : memref<1x128x128xf32, #tpu.memory_space<vmem>>, vector<1x128x128xf32>,
    } else {
    }
    return
  }
  func.func @transform_0(%arg0: i32, %arg1: i32, %arg2: i32) -> (i32, i32, i32) {
    %c0_i32 = arith.constant 0 : i32
    return %arg0, %arg1, %arg2 : i32, i32, i32
  }
  func.func @transform_1(%arg0: i32, %arg1: i32, %arg2: i32) -> (i32, i32, i32) {
    %c0_i32 = arith.constant 0 : i32
    %c0_i32_0 = arith.constant 0 : i32
    return %arg0, %arg2, %c0_i32 : i32, i32, i32
  }
  func.func @transform_2(%arg0: i32, %arg1: i32, %arg2: i32) -> (i32, i32) {
    %c0_i32 = arith.constant 0 : i32
    %c0_i32_0 = arith.constant 0 : i32
    %c0_i32_1 = arith.constant 0 : i32
    return %c0_i32, %c0_i32_0 : i32, i32
  }
  func.func @transform_3(%arg0: i32, %arg1: i32, %arg2: i32) -> (i32, i32) {
    %c0_i32 = arith.constant 0 : i32
    %c0_i32_0 = arith.constant 0 : i32
    %c0_i32_1 = arith.constant 0 : i32
    return %c0_i32, %c0_i32_0 : i32, i32
  }
  func.func @transform_4(%arg0: i32, %arg1: i32, %arg2: i32) -> (i32, i32) {
    %c0_i32 = arith.constant 0 : i32
    %c0_i32_0 = arith.constant 0 : i32
    %c0_i32_1 = arith.constant 0 : i32
    return %c0_i32, %c0_i32_0 : i32, i32
  }
  func.func @transform_5(%arg0: i32, %arg1: i32, %arg2: i32) -> (i32, i32, i32) {
    %c0_i32 = arith.constant 0 : i32
    %c0_i32_0 = arith.constant 0 : i32
    return %arg0, %arg1, %c0_i32 : i32, i32, i32
  }
}

</mosaic_0001>

<llo_original>
// kernel: tpu_custom_call.1
$region0: #{tpu_custom_call.1}
  #allocation0 [shape = 'u32[]', space=smem, size = 0x4, offset = 0x4, fixed_abs, tag = 'smem constant byte address 0x4 - core index']
  #allocation1 [shape = 'u32[144,128]{1,0:T(1,128)}', space=vmem, size = 0x12000, scoped, tag = 'internal scratch']
  #allocation2 [shape = 'f32[128,8]{1,0:T(8,128)}', space=vmem, size = 0x10000, scoped, tag = 'scratch operand']
  #allocation3 [shape = 'f32[1,1]{1,0:T(1,128)S(6)}', space=smem, size = 0x200, scoped, tag = 'scoped memory for tpu_custom_call.1']
  %s0 = inlined_call_operand.vmem [shape: f32[2,128,128], index: 0, kind: input, shape index: {}]
  %s1 = inlined_call_operand.vmem [shape: f32[2,128,8], index: 1, kind: input, shape index: {}]
  %s2 = inlined_call_operand.vmem [shape: f32[8,128], index: 2, kind: input, shape index: {}]
  %s3 = inlined_call_operand.vmem [shape: f32[1,128], index: 3, kind: input, shape index: {}]
  %s4 = inlined_call_operand.<no memory space> [shape: f32[1,1], index: 4, kind: input, shape index: {}]
  %s5 = inlined_call_operand.hbm [shape: f32[2,128,128], index: 5, kind: output, shape index: {}]
  %s6 = sld [smem:[#allocation0]]
  $region61: #{tpu_custom_call.1} parent=0
    _
  %s8 = ssub.s32 1, %s6
  %s9 = scalar_select 0, %s8, %s6
  %10 = sst [smem:[#allocation3]] %s4
  $region1: #{tpu_custom_call.1} parent=0
    #allocation4 [shape = 'u8[131072]{0}', space=vmem, size = 0x20000, scoped, tag = 'output window, operand 0']
    #allocation5 [shape = 's32[2]{0}', space=sflag, size = 0x8, scoped, tag = 'scoped memory for tpu_custom_call.1']
    %11 = vsyncpa [#allocation5], 0
    %s12 = scalar_lea.sflag [#allocation5], 1
    %13 = vsyncpa %s12, 0
    loop: start=0, step=1, limit=4
    $region2: #{tpu_custom_call.1} parent=1 // loop_pre_header
      _
    $region3: #{tpu_custom_call.1} parent=1 // loop_header
      %s15 = sphi 0, %s19
      %p16 = scmp.ge.s32.totalorder %s15, 4
      %s22 = sphi 0, %s41
      %s23 = sphi 0, %s37
      %s24 = sphi 0, %s33
      %s25 = sphi 0, %s22
      %s26 = sphi 0, %s23
      %s27 = sphi 0, %s24
      %s28 = sphi 0, %s25
      %s29 = sphi 0, %s26
      %s30 = sphi 0, %s27
      %s48 = sphi 0, %s50
      %s51 = sphi 0, %s48
      %s52 = sphi 0, %s51
      %s68 = sphi 0, %s52
      %s76 = sphi 0, %s78
      %s79 = sphi 0, %s76
      %s80 = sphi 0, %s79
      %s96 = sphi 0, %s80
      %s100 = sphi 0, %s100
      %s102 = sphi 0, %s100
      %s103 = sphi 0, %s102
      %s117 = sphi 0, %s103
      %s121 = sphi 0, %s121
      %s123 = sphi 0, %s121
      %s124 = sphi 0, %s123
      %s138 = sphi 0, %s124
      %s142 = sphi 0, %s142
      %s144 = sphi 0, %s142
      %s145 = sphi 0, %s144
      %s159 = sphi 0, %s145
      %s167 = sphi 0, %s169
      %s170 = sphi 0, %s167
      %s171 = sphi 0, %s170
      %s187 = sphi 0, %s171
    $region4: #{tpu_custom_call.1} parent=1 // loop_header_branch
      %18 = sbr.rel (%p16) target = $region8
    $region5: #{tpu_custom_call.1} parent=1 // loop_body
      %s20 = ssub.s32 %s15, 1
      %s21 = ssub.s32 %s15, 2
      %s31 = sadd.s32 1, %s24
      %p32 = scmp.ge.s32.totalorder %s31, 1
      %s33 = scalar_select %p32, 0, %s31
      %s34 = sadd.s32 1, %s23
      %s35 = scalar_select %p32, %s34, %s23
      %p36 = scmp.ge.s32.totalorder %s35, 1
      %s37 = scalar_select %p36, 0, %s35
      %s38 = sadd.s32 1, %s22
      %s39 = scalar_select %p36, %s38, %s22
      %p40 = scmp.ge.s32.totalorder %s39, 2
      %s41 = scalar_select %p40, 0, %s39
      %s42 = ssub.s32 %s22, %s41
      %s43 = ssub.s32 %s23, %s37
      %s44 = sor.u32 %s42, %s43
      %s45 = ssub.s32 %s24, %s33
      %s46 = sor.u32 %s44, %s45
      %p47 = scmp.eq.s32.totalorder %s46, 0
      %s49 = sadd.s32 %s48, 1
      %s50 = scalar_select %p47, %s48, %s49
      %p53 = pneg %p47
      %p54 = scmp.eq.s32.totalorder %s15, 1
      %p55 = por %p53, %p54
      %p56 = scmp.ne.s32.totalorder %s48, %s51
      %p57 = scmp.eq.s32.totalorder %s15, 0
      %p58 = por %p56, %p57
      %p59 = scmp.ne.s32.totalorder %s48, %s51
      %p60 = scmp.eq.s32.totalorder %s20, 1
      %p61 = por %p59, %p60
      %p62 = scmp.ne.s32.totalorder %s51, %s52
      %p63 = scmp.eq.s32.totalorder %s20, 0
      %p64 = por %p62, %p63
      %p65 = scmp.ne.s32.totalorder %s51, %s52
      %p66 = scmp.eq.s32.totalorder %s21, 1
      %p67 = por %p65, %p66
      %p69 = scmp.ne.s32.totalorder %s52, %s68
      %p70 = scmp.eq.s32.totalorder %s21, 0
      %p71 = por %p69, %p70
      %s72 = ssub.s32 %s22, %s41
      %s73 = ssub.s32 %s24, %s33
      %s74 = sor.u32 %s72, %s73
      %p75 = scmp.eq.s32.totalorder %s74, 0
      %s77 = sadd.s32 %s76, 1
      %s78 = scalar_select %p75, %s76, %s77
      %p81 = pneg %p75
      %p82 = scmp.eq.s32.totalorder %s15, 1
      %p83 = por %p81, %p82
      %p84 = scmp.ne.s32.totalorder %s76, %s79
      %p85 = scmp.eq.s32.totalorder %s15, 0
      %p86 = por %p84, %p85
      %p87 = scmp.ne.s32.totalorder %s76, %s79
      %p88 = scmp.eq.s32.totalorder %s20, 1
      %p89 = por %p87, %p88
      %p90 = scmp.ne.s32.totalorder %s79, %s80
      %p91 = scmp.eq.s32.totalorder %s20, 0
      %p92 = por %p90, %p91
      %p93 = scmp.ne.s32.totalorder %s79, %s80
      %p94 = scmp.eq.s32.totalorder %s21, 1
      %p95 = por %p93, %p94
      %p97 = scmp.ne.s32.totalorder %s80, %s96
      %p98 = scmp.eq.s32.totalorder %s21, 0
      %p99 = por %p97, %p98
      %s101 = sadd.s32 %s100, 1
      %p104 = scmp.eq.s32.totalorder %s15, 1
      %p105 = scmp.ne.s32.totalorder %s100, %s102
      %p106 = scmp.eq.s32.totalorder %s15, 0
      %p107 = por %p105, %p106
      %p108 = scmp.ne.s32.totalorder %s100, %s102
      %p109 = scmp.eq.s32.totalorder %s20, 1
      %p110 = por %p108, %p109
      %p111 = scmp.ne.s32.totalorder %s102, %s103
      %p112 = scmp.eq.s32.totalorder %s20, 0
      %p113 = por %p111, %p112
      %p114 = scmp.ne.s32.totalorder %s102, %s103
      %p115 = scmp.eq.s32.totalorder %s21, 1
      %p116 = por %p114, %p115
      %p118 = scmp.ne.s32.totalorder %s103, %s117
      %p119 = scmp.eq.s32.totalorder %s21, 0
      %p120 = por %p118, %p119
      %s122 = sadd.s32 %s121, 1
      %p125 = scmp.eq.s32.totalorder %s15, 1
      %p126 = scmp.ne.s32.totalorder %s121, %s123
      %p127 = scmp.eq.s32.totalorder %s15, 0
      %p128 = por %p126, %p127
      %p129 = scmp.ne.s32.totalorder %s121, %s123
      %p130 = scmp.eq.s32.totalorder %s20, 1
      %p131 = por %p129, %p130
      %p132 = scmp.ne.s32.totalorder %s123, %s124
      %p133 = scmp.eq.s32.totalorder %s20, 0
      %p134 = por %p132, %p133
      %p135 = scmp.ne.s32.totalorder %s123, %s124
      %p136 = scmp.eq.s32.totalorder %s21, 1
      %p137 = por %p135, %p136
      %p139 = scmp.ne.s32.totalorder %s124, %s138
      %p140 = scmp.eq.s32.totalorder %s21, 0
      %p141 = por %p139, %p140
      %s143 = sadd.s32 %s142, 1
      %p146 = scmp.eq.s32.totalorder %s15, 1
      %p147 = scmp.ne.s32.totalorder %s142, %s144
      %p148 = scmp.eq.s32.totalorder %s15, 0
      %p149 = por %p147, %p148
      %p150 = scmp.ne.s32.totalorder %s142, %s144
      %p151 = scmp.eq.s32.totalorder %s20, 1
      %p152 = por %p150, %p151
      %p153 = scmp.ne.s32.totalorder %s144, %s145
      %p154 = scmp.eq.s32.totalorder %s20, 0
      %p155 = por %p153, %p154
      %p156 = scmp.ne.s32.totalorder %s144, %s145
      %p157 = scmp.eq.s32.totalorder %s21, 1
      %p158 = por %p156, %p157
      %p160 = scmp.ne.s32.totalorder %s145, %s159
      %p161 = scmp.eq.s32.totalorder %s21, 0
      %p162 = por %p160, %p161
      %s163 = ssub.s32 %s22, %s41
      %s164 = ssub.s32 %s23, %s37
      %s165 = sor.u32 %s163, %s164
      %p166 = scmp.eq.s32.totalorder %s165, 0
      %s168 = sadd.s32 %s167, 1
      %s169 = scalar_select %p166, %s167, %s168
      %p172 = pneg %p166
      %p173 = scmp.eq.s32.totalorder %s15, 1
      %p174 = por %p172, %p173
      %p175 = scmp.ne.s32.totalorder %s167, %s170
      %p176 = scmp.eq.s32.totalorder %s15, 0
      %p177 = por %p175, %p176
      %p178 = scmp.ne.s32.totalorder %s167, %s170
      %p179 = scmp.eq.s32.totalorder %s20, 1
      %p180 = por %p178, %p179
      %p181 = scmp.ne.s32.totalorder %s170, %s171
      %p182 = scmp.eq.s32.totalorder %s20, 0
      %p183 = por %p181, %p182
      %p184 = scmp.ne.s32.totalorder %s170, %s171
      %p185 = scmp.eq.s32.totalorder %s21, 1
      %p186 = por %p184, %p185
      %p188 = scmp.ne.s32.totalorder %s171, %s187
      %p189 = scmp.eq.s32.totalorder %s21, 0
      %p190 = por %p188, %p189
      %p191 = scmp.le.s32.totalorder 1, %s15
      %p192 = scmp.lt.s32.totalorder %s15, 3
      %p193 = pnand %p191, %p192
      %p194 = pneg %p193
      // Predicated region
      $region9: #{tpu_custom_call.1} parent=5 // pred_check
        _
      $region10: #{tpu_custom_call.1} parent=5 // pred_check_branch
        %196 = sbr.rel (%p193) target = $region12
      $region11: #{tpu_custom_call.1} parent=5 // pred_region
        %s197 = ssub.s32 %s15, 1
        // Predicated region
        $region13: #{tpu_custom_call.1} parent=11 // pred_check
          %p198 = pneg %p113
        $region14: #{tpu_custom_call.1} parent=11 // pred_check_branch
          %200 = sbr.rel (%p198) target = $region16
        $region15: #{tpu_custom_call.1} parent=11 // pred_region
          _
        $region16: #{tpu_custom_call.1} parent=11 // pred_fallthru
          _
        // Predicated region
        $region17: #{tpu_custom_call.1} parent=11 // pred_check
          %p201 = pneg %p134
        $region18: #{tpu_custom_call.1} parent=11 // pred_check_branch
          %203 = sbr.rel (%p201) target = $region20
        $region19: #{tpu_custom_call.1} parent=11 // pred_region
          _
        $region20: #{tpu_custom_call.1} parent=11 // pred_fallthru
          _
        // Predicated region
        $region21: #{tpu_custom_call.1} parent=11 // pred_check
          %p204 = pneg %p155
        $region22: #{tpu_custom_call.1} parent=11 // pred_check_branch
          %206 = sbr.rel (%p204) target = $region24
        $region23: #{tpu_custom_call.1} parent=11 // pred_region
          _
        $region24: #{tpu_custom_call.1} parent=11 // pred_fallthru
          _
      $region12: #{tpu_custom_call.1} parent=5 // pred_fallthru
        _
      %p207 = scmp.lt.s32.totalorder %s15, 2
      // Predicated region
      $region25: #{tpu_custom_call.1} parent=5 // pred_check
        %p208 = pneg %p207
      $region26: #{tpu_custom_call.1} parent=5 // pred_check_branch
        %210 = sbr.rel (%p208) target = $region28
      $region27: #{tpu_custom_call.1} parent=5 // pred_region
        // Predicated region
        $region29: #{tpu_custom_call.1} parent=27 // pred_check
          %p211 = pneg %p58
        $region30: #{tpu_custom_call.1} parent=27 // pred_check_branch
          %213 = sbr.rel (%p211) target = $region32
        $region31: #{tpu_custom_call.1} parent=27 // pred_region
          %s214 = smul.u32 16, %s23
          %p215 = scmp.lt.s32.totalorder %s22, 1
          %s216 = scalar_select %p215, %s22, 1
          %p217 = scmp.lt.s32.totalorder %s214, 15
          %s218 = scalar_select %p217, %s214, 15
          %p219 = scmp.lt.s32.totalorder %s24, 0
          %s220 = scalar_select %p219, %s24, 0
          %s221 = sadd.s32 %s220, %s218
          %s222 = smul.addr %s216, 16
          %s223 = sadd.s32 %s221, %s222
          %s224 = smul.addr %s223, 8
          %s225 = scalar_lea.vmem %s0, %s224
          %s226 = smul.u32 16, %s23
        $region32: #{tpu_custom_call.1} parent=27 // pred_fallthru
          _
        // Predicated region
        $region33: #{tpu_custom_call.1} parent=27 // pred_check
          %p227 = pneg %p86
        $region34: #{tpu_custom_call.1} parent=27 // pred_check_branch
          %229 = sbr.rel (%p227) target = $region36
        $region35: #{tpu_custom_call.1} parent=27 // pred_region
          %s230 = smul.u32 16, %s24
          %p231 = scmp.lt.s32.totalorder %s22, 1
          %s232 = scalar_select %p231, %s22, 1
          %p233 = scmp.lt.s32.totalorder %s230, 15
          %s234 = scalar_select %p233, %s230, 15
          %s235 = smul.addr %s232, 16
          %s236 = sadd.s32 %s234, %s235
          %s237 = smul.addr %s236, 8
          %s238 = scalar_lea.vmem %s1, %s237
          %s239 = smul.u32 16, %s24
        $region36: #{tpu_custom_call.1} parent=27 // pred_fallthru
          _
      $region28: #{tpu_custom_call.1} parent=5 // pred_fallthru
        _
      %p240 = scmp.le.s32.totalorder 1, %s15
      %p241 = scmp.lt.s32.totalorder %s15, 3
      %p242 = pnand %p240, %p241
      %p243 = pneg %p242
      // Predicated region
      $region37: #{tpu_custom_call.1} parent=5 // pred_check
        _
      $region38: #{tpu_custom_call.1} parent=5 // pred_check_branch
        %245 = sbr.rel (%p242) target = $region40
      $region39: #{tpu_custom_call.1} parent=5 // pred_region
        %s246 = ssub.s32 %s15, 1
        %s247 = smul.u32 16, %s26
        %p248 = scmp.lt.s32.totalorder %s25, 1
        %s249 = scalar_select %p248, %s25, 1
        %p250 = scmp.lt.s32.totalorder %s247, 15
        %s251 = scalar_select %p250, %s247, 15
        %p252 = scmp.lt.s32.totalorder %s27, 0
        %s253 = scalar_select %p252, %s27, 0
        %s254 = sadd.s32 %s253, %s251
        %s255 = smul.addr %s249, 16
        %s256 = sadd.s32 %s254, %s255
        %s257 = smul.addr %s256, 8
        %s258 = scalar_lea.vmem %s0, %s257
        %p259 = pneg %p64
        %p260 = pneg %p61
        %s261 = smul.u32 16, %s27
        %p262 = scmp.lt.s32.totalorder %s25, 1
        %s263 = scalar_select %p262, %s25, 1
        %p264 = scmp.lt.s32.totalorder %s261, 15
        %s265 = scalar_select %p264, %s261, 15
        %s266 = smul.addr %s263, 16
        %s267 = sadd.s32 %s265, %s266
        %s268 = smul.addr %s267, 8
        %s269 = scalar_lea.vmem %s1, %s268
        %p270 = pneg %p92
        %p271 = pneg %p89
        %p272 = pneg %p113
        %p273 = pneg %p110
        %p274 = pneg %p134
        %p275 = pneg %p131
        %p276 = pneg %p155
        %p277 = pneg %p152
        %p278 = pneg %p183
        %p279 = pneg %p180
        %s280 = sand.u32 %s170, 1
        %s281 = scalar_lea.sflag [#allocation5], %s280
        %s282 = sand.u32 %s170, 1
        %s283 = smul.addr %s282, 128
        %s284 = scalar_lea.vmem [#allocation4], %s283
        %s285 = smul.u32 16, %s26
        %p286 = scmp.lt.s32.totalorder %s25, 1
        %s287 = scalar_select %p286, %s25, 1
        %p288 = scmp.lt.s32.totalorder %s285, 15
        %s289 = scalar_select %p288, %s285, 15
        %p290 = scmp.lt.s32.totalorder %s27, 0
        %s291 = scalar_select %p290, %s27, 0
        %s292 = sadd.s32 %s291, %s289
        %s293 = smul.addr %s287, 16
        %s294 = sadd.s32 %s292, %s293
        %s295 = smul.addr %s294, 8
        %s296 = scalar_lea.vmem %s0, %s295
        %s297 = smul.u32 16, %s26
        %s298 = smul.u32 16, %s27
        %p299 = scmp.lt.s32.totalorder %s25, 1
        %s300 = scalar_select %p299, %s25, 1
        %p301 = scmp.lt.s32.totalorder %s298, 15
        %s302 = scalar_select %p301, %s298, 15
        %s303 = smul.addr %s300, 16
        %s304 = sadd.s32 %s302, %s303
        %s305 = smul.addr %s304, 8
        %s306 = scalar_lea.vmem %s1, %s305
        %s307 = smul.u32 16, %s27
        %s308 = smul.u32 16, %s26
        %p309 = scmp.eq.s32.totalorder %s27, 0
        // Predicated region
        $region41: #{tpu_custom_call.1} parent=39 // pred_check
          %p310 = pneg %p309
        $region42: #{tpu_custom_call.1} parent=39 // pred_check_branch
          %312 = sbr.rel (%p310) target = $region44
        $region43: #{tpu_custom_call.1} parent=39 // pred_region
          %vm313 = vcmask 64512
          %314 = vst.msk [vmem:[#allocation2] sm:$0xff] %vm313, 0.0
          %315 = vst.msk [vmem:[#allocation2 + $0x8] sm:$0xff] %vm313, 0.0
          %316 = vst.msk [vmem:[#allocation2 + $0x10] sm:$0xff] %vm313, 0.0
          %317 = vst.msk [vmem:[#allocation2 + $0x18] sm:$0xff] %vm313, 0.0
          %318 = vst.msk [vmem:[#allocation2 + $0x20] sm:$0xff] %vm313, 0.0
          %319 = vst.msk [vmem:[#allocation2 + $0x28] sm:$0xff] %vm313, 0.0
          %320 = vst.msk [vmem:[#allocation2 + $0x30] sm:$0xff] %vm313, 0.0
          %321 = vst.msk [vmem:[#allocation2 + $0x38] sm:$0xff] %vm313, 0.0
          %322 = vst.msk [vmem:[#allocation2 + $0x40] sm:$0xff] %vm313, 0.0
          %323 = vst.msk [vmem:[#allocation2 + $0x48] sm:$0xff] %vm313, 0.0
          %324 = vst.msk [vmem:[#allocation2 + $0x50] sm:$0xff] %vm313, 0.0
          %325 = vst.msk [vmem:[#allocation2 + $0x58] sm:$0xff] %vm313, 0.0
          %326 = vst.msk [vmem:[#allocation2 + $0x60] sm:$0xff] %vm313, 0.0
          %327 = vst.msk [vmem:[#allocation2 + $0x68] sm:$0xff] %vm313, 0.0
          %328 = vst.msk [vmem:[#allocation2 + $0x70] sm:$0xff] %vm313, 0.0
          %329 = vst.msk [vmem:[#allocation2 + $0x78] sm:$0xff] %vm313, 0.0
        $region44: #{tpu_custom_call.1} parent=39 // pred_fallthru
          _
        %v330 = vld [vmem:[#allocation2] sm:$0xff]
        %v331 = vld [vmem:[#allocation2 + $0x8] sm:$0xff]
        %v332 = vld [vmem:[#allocation2 + $0x10] sm:$0xff]
        %v333 = vld [vmem:[#allocation2 + $0x18] sm:$0xff]
        %v334 = vld [vmem:[#allocation2 + $0x20] sm:$0xff]
        %v335 = vld [vmem:[#allocation2 + $0x28] sm:$0xff]
        %v336 = vld [vmem:[#allocation2 + $0x30] sm:$0xff]
        %v337 = vld [vmem:[#allocation2 + $0x38] sm:$0xff]
        %v338 = vld [vmem:[#allocation2 + $0x40] sm:$0xff]
        %v339 = vld [vmem:[#allocation2 + $0x48] sm:$0xff]
        %v340 = vld [vmem:[#allocation2 + $0x50] sm:$0xff]
        %v341 = vld [vmem:[#allocation2 + $0x58] sm:$0xff]
        %v342 = vld [vmem:[#allocation2 + $0x60] sm:$0xff]
        %v343 = vld [vmem:[#allocation2 + $0x68] sm:$0xff]
        %v344 = vld [vmem:[#allocation2 + $0x70] sm:$0xff]
        %v345 = vld [vmem:[#allocation2 + $0x78] sm:$0xff]
        %v346 = vld [vmem:[%s296] sm:$0xff]
        %v347 = vld [vmem:[%s296 + $0x8] sm:$0xff]
        %v348 = vld [vmem:[%s296 + $0x10] sm:$0xff]
        %v349 = vld [vmem:[%s296 + $0x18] sm:$0xff]
        %v350 = vld [vmem:[%s296 + $0x20] sm:$0xff]
        %v351 = vld [vmem:[%s296 + $0x28] sm:$0xff]
        %v352 = vld [vmem:[%s296 + $0x30] sm:$0xff]
        %v353 = vld [vmem:[%s296 + $0x38] sm:$0xff]
        %v354 = vld [vmem:[%s296 + $0x40] sm:$0xff]
        %v355 = vld [vmem:[%s296 + $0x48] sm:$0xff]
        %v356 = vld [vmem:[%s296 + $0x50] sm:$0xff]
        %v357 = vld [vmem:[%s296 + $0x58] sm:$0xff]
        %v358 = vld [vmem:[%s296 + $0x60] sm:$0xff]
        %v359 = vld [vmem:[%s296 + $0x68] sm:$0xff]
        %v360 = vld [vmem:[%s296 + $0x70] sm:$0xff]
        %v361 = vld [vmem:[%s296 + $0x78] sm:$0xff]
        %v362 = vld [vmem:[%s306] sm:$0xff]
        %v363 = vld [vmem:[%s306 + $0x8] sm:$0xff]
        %v364 = vld [vmem:[%s306 + $0x10] sm:$0xff]
        %v365 = vld [vmem:[%s306 + $0x18] sm:$0xff]
        %v366 = vld [vmem:[%s306 + $0x20] sm:$0xff]
        %v367 = vld [vmem:[%s306 + $0x28] sm:$0xff]
        %v368 = vld [vmem:[%s306 + $0x30] sm:$0xff]
        %v369 = vld [vmem:[%s306 + $0x38] sm:$0xff]
        %v370 = vld [vmem:[%s306 + $0x40] sm:$0xff]
        %v371 = vld [vmem:[%s306 + $0x48] sm:$0xff]
        %v372 = vld [vmem:[%s306 + $0x50] sm:$0xff]
        %v373 = vld [vmem:[%s306 + $0x58] sm:$0xff]
        %v374 = vld [vmem:[%s306 + $0x60] sm:$0xff]
        %v375 = vld [vmem:[%s306 + $0x68] sm:$0xff]
        %v376 = vld [vmem:[%s306 + $0x70] sm:$0xff]
        %v377 = vld [vmem:[%s306 + $0x78] sm:$0xff]
        %378 = vmatprep.subr.mxu0 0.0
        %379 = vmatpush1.msra.mxu0 %v362
        %380 = vmatprep.subr.mxu0 0.0
        %381 = vmatpush1.msra.mxu0 %v363
        %382 = vmatprep.subr.mxu0 0.0
        %383 = vmatpush1.msra.mxu0 %v364
        %384 = vmatprep.subr.mxu0 0.0
        %385 = vmatpush1.msra.mxu0 %v365
        %386 = vmatprep.subr.mxu0 0.0
        %387 = vmatpush1.msra.mxu0 %v366
        %388 = vmatprep.subr.mxu0 0.0
        %389 = vmatpush1.msra.mxu0 %v367
        %390 = vmatprep.subr.mxu0 0.0
        %391 = vmatpush1.msra.mxu0 %v368
        %392 = vmatprep.subr.mxu0 0.0
        %393 = vmatpush1.msra.mxu0 %v369
        %394 = vmatprep.subr.mxu0 0.0
        %395 = vmatpush1.msra.mxu0 %v370
        %396 = vmatprep.subr.mxu0 0.0
        %397 = vmatpush1.msra.mxu0 %v371
        %398 = vmatprep.subr.mxu0 0.0
        %399 = vmatpush1.msra.mxu0 %v372
        %400 = vmatprep.subr.mxu0 0.0
        %401 = vmatpush1.msra.mxu0 %v373
        %402 = vmatprep.subr.mxu0 0.0
        %403 = vmatpush1.msra.mxu0 %v374
        %404 = vmatprep.subr.mxu0 0.0
        %405 = vmatpush1.msra.mxu0 %v375
        %406 = vmatprep.subr.mxu0 0.0
        %407 = vmatpush1.msra.mxu0 %v376
        %408 = vmatprep.subr.mxu0 0.0
        %409 = vmatpush1.msra.mxu0 %v377
        %410 = vmatprep.subr.mxu0 0.0
        %411 = vmatpush1.msra.mxu0 0.0
        %412 = vmatprep.subr.mxu0 0.0
        %413 = vmatpush1.msra.mxu0 0.0
        %414 = vmatprep.subr.mxu0 0.0
        %415 = vmatpush1.msra.mxu0 0.0
        %416 = vmatprep.subr.mxu0 0.0
        %417 = vmatpush1.msra.mxu0 0.0
        %418 = vmatprep.subr.mxu0 0.0
        %419 = vmatpush1.msra.mxu0 0.0
        %420 = vmatprep.subr.mxu0 0.0
        %421 = vmatpush1.msra.mxu0 0.0
        %422 = vmatprep.subr.mxu0 0.0
        %423 = vmatpush1.msra.mxu0 0.0
        %424 = vmatprep.subr.mxu0 0.0
        %425 = vmatpush1.msra.mxu0 0.0
        %426 = vmatprep.subr.mxu0 0.0
        %427 = vmatpush1.msra.mxu0 0.0
        %428 = vmatprep.subr.mxu0 0.0
        %429 = vmatpush1.msra.mxu0 0.0
        %430 = vmatprep.subr.mxu0 0.0
        %431 = vmatpush1.msra.mxu0 0.0
        %432 = vmatprep.subr.mxu0 0.0
        %433 = vmatpush1.msra.mxu0 0.0
        %434 = vmatprep.subr.mxu0 0.0
        %435 = vmatpush1.msra.mxu0 0.0
        %436 = vmatprep.subr.mxu0 0.0
        %437 = vmatpush1.msra.mxu0 0.0
        %438 = vmatprep.subr.mxu0 0.0
        %439 = vmatpush1.msra.mxu0 0.0
        %440 = vmatprep.subr.mxu0 0.0
        %441 = vmatpush1.msra.mxu0 0.0
        %442 = vmatprep.mubr.f32.mxu0 0.0
        %443 = vmatmul.mubr.f32.gmra.mrb[0].mxu0 %v346
        %v444 = vpop.f32.mrb[0].mxu0
        %v445 = vadd.f32 0.0, %v444
        %v446 = vpop.f32.mrb[0].mxu0
        %447 = vmatprep.mubr.f32.mxu0 0.0
        %448 = vmatmul.mubr.f32.gmra.mrb[0].mxu0 %v347
        %v449 = vpop.f32.mrb[0].mxu0
        %v450 = vadd.f32 0.0, %v449
        %v451 = vpop.f32.mrb[0].mxu0
        %452 = vmatprep.mubr.f32.mxu0 0.0
        %453 = vmatmul.mubr.f32.gmra.mrb[0].mxu0 %v348
        %v454 = vpop.f32.mrb[0].mxu0
        %v455 = vadd.f32 0.0, %v454
        %v456 = vpop.f32.mrb[0].mxu0
        %457 = vmatprep.mubr.f32.mxu0 0.0
        %458 = vmatmul.mubr.f32.gmra.mrb[0].mxu0 %v349
        %v459 = vpop.f32.mrb[0].mxu0
        %v460 = vadd.f32 0.0, %v459
        %v461 = vpop.f32.mrb[0].mxu0
        %462 = vmatprep.mubr.f32.mxu0 0.0
        %463 = vmatmul.mubr.f32.gmra.mrb[0].mxu0 %v350
        %v464 = vpop.f32.mrb[0].mxu0
        %v465 = vadd.f32 0.0, %v464
        %v466 = vpop.f32.mrb[0].mxu0
        %467 = vmatprep.mubr.f32.mxu0 0.0
        %468 = vmatmul.mubr.f32.gmra.mrb[0].mxu0 %v351
        %v469 = vpop.f32.mrb[0].mxu0
        %v470 = vadd.f32 0.0, %v469
        %v471 = vpop.f32.mrb[0].mxu0
        %472 = vmatprep.mubr.f32.mxu0 0.0
        %473 = vmatmul.mubr.f32.gmra.mrb[0].mxu0 %v352
        %v474 = vpop.f32.mrb[0].mxu0
        %v475 = vadd.f32 0.0, %v474
        %v476 = vpop.f32.mrb[0].mxu0
        %477 = vmatprep.mubr.f32.mxu0 0.0
        %478 = vmatmul.mubr.f32.gmra.mrb[0].mxu0 %v353
        %v479 = vpop.f32.mrb[0].mxu0
        %v480 = vadd.f32 0.0, %v479
        %v481 = vpop.f32.mrb[0].mxu0
        %482 = vmatprep.mubr.f32.mxu0 0.0
        %483 = vmatmul.mubr.f32.gmra.mrb[0].mxu0 %v354
        %v484 = vpop.f32.mrb[0].mxu0
        %v485 = vadd.f32 0.0, %v484
        %v486 = vpop.f32.mrb[0].mxu0
        %487 = vmatprep.mubr.f32.mxu0 0.0
        %488 = vmatmul.mubr.f32.gmra.mrb[0].mxu0 %v355
        %v489 = vpop.f32.mrb[0].mxu0
        %v490 = vadd.f32 0.0, %v489
        %v491 = vpop.f32.mrb[0].mxu0
        %492 = vmatprep.mubr.f32.mxu0 0.0
        %493 = vmatmul.mubr.f32.gmra.mrb[0].mxu0 %v356
        %v494 = vpop.f32.mrb[0].mxu0
        %v495 = vadd.f32 0.0, %v494
        %v496 = vpop.f32.mrb[0].mxu0
        %497 = vmatprep.mubr.f32.mxu0 0.0
        %498 = vmatmul.mubr.f32.gmra.mrb[0].mxu0 %v357
        %v499 = vpop.f32.mrb[0].mxu0
        %v500 = vadd.f32 0.0, %v499
        %v501 = vpop.f32.mrb[0].mxu0
        %502 = vmatprep.mubr.f32.mxu0 0.0
        %503 = vmatmul.mubr.f32.gmra.mrb[0].mxu0 %v358
        %v504 = vpop.f32.mrb[0].mxu0
        %v505 = vadd.f32 0.0, %v504
        %v506 = vpop.f32.mrb[0].mxu0
        %507 = vmatprep.mubr.f32.mxu0 0.0
        %508 = vmatmul.mubr.f32.gmra.mrb[0].mxu0 %v359
        %v509 = vpop.f32.mrb[0].mxu0
        %v510 = vadd.f32 0.0, %v509
        %v511 = vpop.f32.mrb[0].mxu0
        %512 = vmatprep.mubr.f32.mxu0 0.0
        %513 = vmatmul.mubr.f32.gmra.mrb[0].mxu0 %v360
        %v514 = vpop.f32.mrb[0].mxu0
        %v515 = vadd.f32 0.0, %v514
        %v516 = vpop.f32.mrb[0].mxu0
        %517 = vmatprep.mubr.f32.mxu0 0.0
        %518 = vmatmul.mubr.f32.gmra.mrb[0].mxu0 %v361
        %v519 = vpop.f32.mrb[0].mxu0
        %v520 = vadd.f32 0.0, %v519
        %v521 = vpop.f32.mrb[0].mxu0
        %522 = vdwg.mxu0
        %v523 = vadd.f32 %v330, %v445
        %v524 = vadd.f32 %v331, %v450
        %v525 = vadd.f32 %v332, %v455
        %v526 = vadd.f32 %v333, %v460
        %v527 = vadd.f32 %v334, %v465
        %v528 = vadd.f32 %v335, %v470
        %v529 = vadd.f32 %v336, %v475
        %v530 = vadd.f32 %v337, %v480
        %v531 = vadd.f32 %v338, %v485
        %v532 = vadd.f32 %v339, %v490
        %v533 = vadd.f32 %v340, %v495
        %v534 = vadd.f32 %v341, %v500
        %v535 = vadd.f32 %v342, %v505
        %v536 = vadd.f32 %v343, %v510
        %v537 = vadd.f32 %v344, %v515
        %v538 = vadd.f32 %v345, %v520
        %vm539 = vcmask 64512
        %540 = vst.msk [vmem:[#allocation2] sm:$0xff] %vm539, %v523
        %541 = vst.msk [vmem:[#allocation2 + $0x8] sm:$0xff] %vm539, %v524
        %542 = vst.msk [vmem:[#allocation2 + $0x10] sm:$0xff] %vm539, %v525
        %543 = vst.msk [vmem:[#allocation2 + $0x18] sm:$0xff] %vm539, %v526
        %544 = vst.msk [vmem:[#allocation2 + $0x20] sm:$0xff] %vm539, %v527
        %545 = vst.msk [vmem:[#allocation2 + $0x28] sm:$0xff] %vm539, %v528
        %546 = vst.msk [vmem:[#allocation2 + $0x30] sm:$0xff] %vm539, %v529
        %547 = vst.msk [vmem:[#allocation2 + $0x38] sm:$0xff] %vm539, %v530
        %548 = vst.msk [vmem:[#allocation2 + $0x40] sm:$0xff] %vm539, %v531
        %549 = vst.msk [vmem:[#allocation2 + $0x48] sm:$0xff] %vm539, %v532
        %550 = vst.msk [vmem:[#allocation2 + $0x50] sm:$0xff] %vm539, %v533
        %551 = vst.msk [vmem:[#allocation2 + $0x58] sm:$0xff] %vm539, %v534
        %552 = vst.msk [vmem:[#allocation2 + $0x60] sm:$0xff] %vm539, %v535
        %553 = vst.msk [vmem:[#allocation2 + $0x68] sm:$0xff] %vm539, %v536
        %554 = vst.msk [vmem:[#allocation2 + $0x70] sm:$0xff] %vm539, %v537
        %555 = vst.msk [vmem:[#allocation2 + $0x78] sm:$0xff] %vm539, %v538
        // Predicated region
        $region45: #{tpu_custom_call.1} parent=39 // pred_check
          %p556 = pneg %p309
        $region46: #{tpu_custom_call.1} parent=39 // pred_check_branch
          %558 = sbr.rel (%p556) target = $region48
        $region47: #{tpu_custom_call.1} parent=39 // pred_region
          %v559 = vld [vmem:[#allocation2] sm:$0xff]
          %v560 = vld [vmem:[#allocation2 + $0x8] sm:$0xff]
          %v561 = vld [vmem:[#allocation2 + $0x10] sm:$0xff]
          %v562 = vld [vmem:[#allocation2 + $0x18] sm:$0xff]
          %v563 = vld [vmem:[#allocation2 + $0x20] sm:$0xff]
          %v564 = vld [vmem:[#allocation2 + $0x28] sm:$0xff]
          %v565 = vld [vmem:[#allocation2 + $0x30] sm:$0xff]
          %v566 = vld [vmem:[#allocation2 + $0x38] sm:$0xff]
          %v567 = vld [vmem:[#allocation2 + $0x40] sm:$0xff]
          %v568 = vld [vmem:[#allocation2 + $0x48] sm:$0xff]
          %v569 = vld [vmem:[#allocation2 + $0x50] sm:$0xff]
          %v570 = vld [vmem:[#allocation2 + $0x58] sm:$0xff]
          %v571 = vld [vmem:[#allocation2 + $0x60] sm:$0xff]
          %v572 = vld [vmem:[#allocation2 + $0x68] sm:$0xff]
          %v573 = vld [vmem:[#allocation2 + $0x70] sm:$0xff]
          %v574 = vld [vmem:[#allocation2 + $0x78] sm:$0xff]
          %v575 = vld [vmem:[%s2] sm:$0xff]
          %v576 = vld [vmem:[%s3] sm:$0x1]
          %v578 = vlaneseq
          %v579 = vshrl.u32 %v578, 7
          %v580 = vsub.s32 0, %v579
          %v581 = vrot.slane %v576, %v580
          %v584 = vsel %vm539, %v559, 0
          %v587 = vsel %vm539, %v560, 0
          %v590 = vsel %vm539, %v561, 0
          %v593 = vsel %vm539, %v562, 0
          %v596 = vsel %vm539, %v563, 0
          %v599 = vsel %vm539, %v564, 0
          %v602 = vsel %vm539, %v565, 0
          %v605 = vsel %vm539, %v566, 0
          %v608 = vsel %vm539, %v567, 0
          %v611 = vsel %vm539, %v568, 0
          %v614 = vsel %vm539, %v569, 0
          %v617 = vsel %vm539, %v570, 0
          %v620 = vsel %vm539, %v571, 0
          %v623 = vsel %vm539, %v572, 0
          %v626 = vsel %vm539, %v573, 0
          %v629 = vsel %vm539, %v574, 0
          %631 = vmatprep.subr.mxu0 0.0
          %632 = vmatpush1.msra.mxu0 %v575
          %633 = vmatprep.subr.mxu0 0.0
          %634 = vmatpush1.msra.mxu0 0.0
          %635 = vmatprep.subr.mxu0 0.0
          %636 = vmatpush1.msra.mxu0 0.0
          %637 = vmatprep.subr.mxu0 0.0
          %638 = vmatpush1.msra.mxu0 0.0
          %639 = vmatprep.subr.mxu0 0.0
          %640 = vmatpush1.msra.mxu0 0.0
          %641 = vmatprep.subr.mxu0 0.0
          %642 = vmatpush1.msra.mxu0 0.0
          %643 = vmatprep.subr.mxu0 0.0
          %644 = vmatpush1.msra.mxu0 0.0
          %645 = vmatprep.subr.mxu0 0.0
          %646 = vmatpush1.msra.mxu0 0.0
          %647 = vmatprep.subr.mxu0 0.0
          %648 = vmatpush1.msra.mxu0 0.0
          %649 = vmatprep.subr.mxu0 0.0
          %650 = vmatpush1.msra.mxu0 0.0
          %651 = vmatprep.subr.mxu0 0.0
          %652 = vmatpush1.msra.mxu0 0.0
          %653 = vmatprep.subr.mxu0 0.0
          %654 = vmatpush1.msra.mxu0 0.0
          %655 = vmatprep.subr.mxu0 0.0
          %656 = vmatpush1.msra.mxu0 0.0
          %657 = vmatprep.subr.mxu0 0.0
          %658 = vmatpush1.msra.mxu0 0.0
          %659 = vmatprep.subr.mxu0 0.0
          %660 = vmatpush1.msra.mxu0 0.0
          %661 = vmatprep.subr.mxu0 0.0
          %662 = vmatpush1.msra.mxu0 0.0
          %663 = vmatprep.subr.mxu0 0.0
          %664 = vmatpush1.msra.mxu0 0.0
          %665 = vmatprep.subr.mxu0 0.0
          %666 = vmatpush1.msra.mxu0 0.0
          %667 = vmatprep.subr.mxu0 0.0
          %668 = vmatpush1.msra.mxu0 0.0
          %669 = vmatprep.subr.mxu0 0.0
          %670 = vmatpush1.msra.mxu0 0.0
          %671 = vmatprep.subr.mxu0 0.0
          %672 = vmatpush1.msra.mxu0 0.0
          %673 = vmatprep.subr.mxu0 0.0
          %674 = vmatpush1.msra.mxu0 0.0
          %675 = vmatprep.subr.mxu0 0.0
          %676 = vmatpush1.msra.mxu0 0.0
          %677 = vmatprep.subr.mxu0 0.0
          %678 = vmatpush1.msra.mxu0 0.0
          %679 = vmatprep.subr.mxu0 0.0
          %680 = vmatpush1.msra.mxu0 0.0
          %681 = vmatprep.subr.mxu0 0.0
          %682 = vmatpush1.msra.mxu0 0.0
          %683 = vmatprep.subr.mxu0 0.0
          %684 = vmatpush1.msra.mxu0 0.0
          %685 = vmatprep.subr.mxu0 0.0
          %686 = vmatpush1.msra.mxu0 0.0
          %687 = vmatprep.subr.mxu0 0.0
          %688 = vmatpush1.msra.mxu0 0.0
          %689 = vmatprep.subr.mxu0 0.0
          %690 = vmatpush1.msra.mxu0 0.0
          %691 = vmatprep.subr.mxu0 0.0
          %692 = vmatpush1.msra.mxu0 0.0
          %693 = vmatprep.subr.mxu0 0.0
          %694 = vmatpush1.msra.mxu0 0.0
          %695 = vmatprep.mubr.f32.mxu0 0.0
          %696 = vmatmul.mubr.f32.gmra.mrb[0].mxu0 %v584
          %v697 = vpop.f32.mrb[0].mxu0
          %v698 = vadd.f32 %v581, %v697
          %v699 = vpop.f32.mrb[0].mxu0
          %700 = vmatprep.mubr.f32.mxu0 0.0
          %701 = vmatmul.mubr.f32.gmra.mrb[0].mxu0 %v587
          %v702 = vpop.f32.mrb[0].mxu0
          %v703 = vadd.f32 %v581, %v702
          %v704 = vpop.f32.mrb[0].mxu0
          %705 = vmatprep.mubr.f32.mxu0 0.0
          %706 = vmatmul.mubr.f32.gmra.mrb[0].mxu0 %v590
          %v707 = vpop.f32.mrb[0].mxu0
          %v708 = vadd.f32 %v581, %v707
          %v709 = vpop.f32.mrb[0].mxu0
          %710 = vmatprep.mubr.f32.mxu0 0.0
          %711 = vmatmul.mubr.f32.gmra.mrb[0].mxu0 %v593
          %v712 = vpop.f32.mrb[0].mxu0
          %v713 = vadd.f32 %v581, %v712
          %v714 = vpop.f32.mrb[0].mxu0
          %715 = vmatprep.mubr.f32.mxu0 0.0
          %716 = vmatmul.mubr.f32.gmra.mrb[0].mxu0 %v596
          %v717 = vpop.f32.mrb[0].mxu0
          %v718 = vadd.f32 %v581, %v717
          %v719 = vpop.f32.mrb[0].mxu0
          %720 = vmatprep.mubr.f32.mxu0 0.0
          %721 = vmatmul.mubr.f32.gmra.mrb[0].mxu0 %v599
          %v722 = vpop.f32.mrb[0].mxu0
          %v723 = vadd.f32 %v581, %v722
          %v724 = vpop.f32.mrb[0].mxu0
          %725 = vmatprep.mubr.f32.mxu0 0.0
          %726 = vmatmul.mubr.f32.gmra.mrb[0].mxu0 %v602
          %v727 = vpop.f32.mrb[0].mxu0
          %v728 = vadd.f32 %v581, %v727
          %v729 = vpop.f32.mrb[0].mxu0
          %730 = vmatprep.mubr.f32.mxu0 0.0
          %731 = vmatmul.mubr.f32.gmra.mrb[0].mxu0 %v605
          %v732 = vpop.f32.mrb[0].mxu0
          %v733 = vadd.f32 %v581, %v732
          %v734 = vpop.f32.mrb[0].mxu0
          %735 = vmatprep.mubr.f32.mxu0 0.0
          %736 = vmatmul.mubr.f32.gmra.mrb[0].mxu0 %v608
          %v737 = vpop.f32.mrb[0].mxu0
          %v738 = vadd.f32 %v581, %v737
          %v739 = vpop.f32.mrb[0].mxu0
          %740 = vmatprep.mubr.f32.mxu0 0.0
          %741 = vmatmul.mubr.f32.gmra.mrb[0].mxu0 %v611
          %v742 = vpop.f32.mrb[0].mxu0
          %v743 = vadd.f32 %v581, %v742
          %v744 = vpop.f32.mrb[0].mxu0
          %745 = vmatprep.mubr.f32.mxu0 0.0
          %746 = vmatmul.mubr.f32.gmra.mrb[0].mxu0 %v614
          %v747 = vpop.f32.mrb[0].mxu0
          %v748 = vadd.f32 %v581, %v747
          %v749 = vpop.f32.mrb[0].mxu0
          %750 = vmatprep.mubr.f32.mxu0 0.0
          %751 = vmatmul.mubr.f32.gmra.mrb[0].mxu0 %v617
          %v752 = vpop.f32.mrb[0].mxu0
          %v753 = vadd.f32 %v581, %v752
          %v754 = vpop.f32.mrb[0].mxu0
          %755 = vmatprep.mubr.f32.mxu0 0.0
          %756 = vmatmul.mubr.f32.gmra.mrb[0].mxu0 %v620
          %v757 = vpop.f32.mrb[0].mxu0
          %v758 = vadd.f32 %v581, %v757
          %v759 = vpop.f32.mrb[0].mxu0
          %760 = vmatprep.mubr.f32.mxu0 0.0
          %761 = vmatmul.mubr.f32.gmra.mrb[0].mxu0 %v623
          %v762 = vpop.f32.mrb[0].mxu0
          %v763 = vadd.f32 %v581, %v762
          %v764 = vpop.f32.mrb[0].mxu0
          %765 = vmatprep.mubr.f32.mxu0 0.0
          %766 = vmatmul.mubr.f32.gmra.mrb[0].mxu0 %v626
          %v767 = vpop.f32.mrb[0].mxu0
          %v768 = vadd.f32 %v581, %v767
          %v769 = vpop.f32.mrb[0].mxu0
          %770 = vmatprep.mubr.f32.mxu0 0.0
          %771 = vmatmul.mubr.f32.gmra.mrb[0].mxu0 %v629
          %v772 = vpop.f32.mrb[0].mxu0
          %v773 = vadd.f32 %v581, %v772
          %v774 = vpop.f32.mrb[0].mxu0
          %775 = vdwg.mxu0
          %s776 = sld [smem:[#allocation3]]
          %vm777 = vcmp.ge.f32.partialorder %v698, 0.0
          %vm778 = vcmp.ge.f32.partialorder %v703, 0.0
          %vm779 = vcmp.ge.f32.partialorder %v708, 0.0
          %vm780 = vcmp.ge.f32.partialorder %v713, 0.0
          %vm781 = vcmp.ge.f32.partialorder %v718, 0.0
          %vm782 = vcmp.ge.f32.partialorder %v723, 0.0
          %vm783 = vcmp.ge.f32.partialorder %v728, 0.0
          %vm784 = vcmp.ge.f32.partialorder %v733, 0.0
          %vm785 = vcmp.ge.f32.partialorder %v738, 0.0
          %vm786 = vcmp.ge.f32.partialorder %v743, 0.0
          %vm787 = vcmp.ge.f32.partialorder %v748, 0.0
          %vm788 = vcmp.ge.f32.partialorder %v753, 0.0
          %vm789 = vcmp.ge.f32.partialorder %v758, 0.0
          %vm790 = vcmp.ge.f32.partialorder %v763, 0.0
          %vm791 = vcmp.ge.f32.partialorder %v768, 0.0
          %vm792 = vcmp.ge.f32.partialorder %v773, 0.0
          %v793 = vstv %s776
          %v794 = vmul.f32 %v793, %v698
          %v795 = vmul.f32 %v793, %v703
          %v796 = vmul.f32 %v793, %v708
          %v797 = vmul.f32 %v793, %v713
          %v798 = vmul.f32 %v793, %v718
          %v799 = vmul.f32 %v793, %v723
          %v800 = vmul.f32 %v793, %v728
          %v801 = vmul.f32 %v793, %v733
          %v802 = vmul.f32 %v793, %v738
          %v803 = vmul.f32 %v793, %v743
          %v804 = vmul.f32 %v793, %v748
          %v805 = vmul.f32 %v793, %v753
          %v806 = vmul.f32 %v793, %v758
          %v807 = vmul.f32 %v793, %v763
          %v808 = vmul.f32 %v793, %v768
          %v809 = vmul.f32 %v793, %v773
          %v810 = vsel %vm777, %v698, %v794
          %v811 = vsel %vm778, %v703, %v795
          %v812 = vsel %vm779, %v708, %v796
          %v813 = vsel %vm780, %v713, %v797
          %v814 = vsel %vm781, %v718, %v798
          %v815 = vsel %vm782, %v723, %v799
          %v816 = vsel %vm783, %v728, %v800
          %v817 = vsel %vm784, %v733, %v801
          %v818 = vsel %vm785, %v738, %v802
          %v819 = vsel %vm786, %v743, %v803
          %v820 = vsel %vm787, %v748, %v804
          %v821 = vsel %vm788, %v753, %v805
          %v822 = vsel %vm789, %v758, %v806
          %v823 = vsel %vm790, %v763, %v807
          %v824 = vsel %vm791, %v768, %v808
          %v825 = vsel %vm792, %v773, %v809
          %826 = vst [vmem:[%s284] sm:$0xff] %v810
          %827 = vst [vmem:[%s284 + $0x8] sm:$0xff] %v811
          %828 = vst [vmem:[%s284 + $0x10] sm:$0xff] %v812
          %829 = vst [vmem:[%s284 + $0x18] sm:$0xff] %v813
          %830 = vst [vmem:[%s284 + $0x20] sm:$0xff] %v814
          %831 = vst [vmem:[%s284 + $0x28] sm:$0xff] %v815
          %832 = vst [vmem:[%s284 + $0x30] sm:$0xff] %v816
          %833 = vst [vmem:[%s284 + $0x38] sm:$0xff] %v817
          %834 = vst [vmem:[%s284 + $0x40] sm:$0xff] %v818
          %835 = vst [vmem:[%s284 + $0x48] sm:$0xff] %v819
          %836 = vst [vmem:[%s284 + $0x50] sm:$0xff] %v820
          %837 = vst [vmem:[%s284 + $0x58] sm:$0xff] %v821
          %838 = vst [vmem:[%s284 + $0x60] sm:$0xff] %v822
          %839 = vst [vmem:[%s284 + $0x68] sm:$0xff] %v823
          %840 = vst [vmem:[%s284 + $0x70] sm:$0xff] %v824
          %841 = vst [vmem:[%s284 + $0x78] sm:$0xff] %v825
        $region48: #{tpu_custom_call.1} parent=39 // pred_fallthru
          _
        %s842 = sand.u32 %s170, 1
        %s843 = scalar_lea.sflag [#allocation5], %s842
        %s844 = sand.u32 %s170, 1
        %s845 = smul.addr %s844, 128
        %s846 = scalar_lea.vmem [#allocation4], %s845
        // Predicated region
        $region49: #{tpu_custom_call.1} parent=39 // pred_check
          %p847 = pneg %p180
        $region50: #{tpu_custom_call.1} parent=39 // pred_check_branch
          %849 = sbr.rel (%p847) target = $region52
        $region51: #{tpu_custom_call.1} parent=39 // pred_region
          %s850 = smul.u32 16, %s26
          %s852 = ssub.s32 2048, 2048
          %853 = vsyncadd %s843, %s852
          %s854 = smul.addr %s25, 16
          %s855 = sadd.s32 %s850, %s854
          %s856 = smul.addr %s855, 128
          %s857 = scalar_lea.hbm %s5, %s856
          %s858 = sshll.u32 %s846, 4
          %s859 = int_to_ptr.vmem [resolvable:$true] %s858
          %864 = dma.vmem_to_hbm [thread:$0]  %s859, 2048, %s857, %s843, 128, 128, 8
        $region52: #{tpu_custom_call.1} parent=39 // pred_fallthru
          _
      $region40: #{tpu_custom_call.1} parent=5 // pred_fallthru
        _
      %p865 = scmp.le.s32.totalorder 2, %s15
      // Predicated region
      $region53: #{tpu_custom_call.1} parent=5 // pred_check
        %p866 = pneg %p865
      $region54: #{tpu_custom_call.1} parent=5 // pred_check_branch
        %868 = sbr.rel (%p866) target = $region56
      $region55: #{tpu_custom_call.1} parent=5 // pred_region
        %s869 = ssub.s32 %s15, 2
        // Predicated region
        $region57: #{tpu_custom_call.1} parent=55 // pred_check
          %p870 = pneg %p186
        $region58: #{tpu_custom_call.1} parent=55 // pred_check_branch
          %872 = sbr.rel (%p870) target = $region60
        $region59: #{tpu_custom_call.1} parent=55 // pred_region
          %s873 = sand.u32 %s171, 1
          %s874 = scalar_lea.sflag [#allocation5], %s873
          %s875 = sand.u32 %s171, 1
          %s876 = smul.addr %s875, 128
          %s877 = scalar_lea.vmem [#allocation4], %s876
          %878 = dma.done %s874, 2048
        $region60: #{tpu_custom_call.1} parent=55 // pred_fallthru
          _
      $region56: #{tpu_custom_call.1} parent=5 // pred_fallthru
        _
    $region6: #{tpu_custom_call.1} parent=1 // loop_footer
      %s19 = sadd.s32 1, %s15
    $region7: #{tpu_custom_call.1} parent=1 // loop_footer_branch
      %14 = sbr.rel target = $region3
    $region8: #{tpu_custom_call.1} parent=1 // loop_exit
      _
    %879 = vsyncpa [#allocation5], 1
    %s880 = scalar_lea.sflag [#allocation5], 1
    %881 = vsyncpa %s880, 1

</llo_original>
